<compile_context>
chip_gen: v7x
topology: tpu7x:2x2x1
jax: 0.10.0
libtpu: 0.0.40
codegen_flags: <defaults>
</compile_context>

<pallas_src>
import math

import jax
import jax.numpy as jnp
from jax.experimental import pallas as pl
from jax.experimental.pallas import tpu as pltpu


def _round_up(x, m):
    return ((x + m - 1) // m) * m


def _choose_tiling(n_rows, group):
    """Pick (block_m, grid_m, padded_rows); block_m is in group-rows (G samples)."""
    m = pl.cdiv(n_rows, group)          # group-rows needed
    target = 1024                       # ~8192 samples / tile at group=8 (~0.5-2 MiB tiles)
    if n_rows <= 256:
        grid_m = 1                      # tiny batch: one tile, no grid overhead
    else:
        # >=2 steps so v7x megacore gets both TCs busy and pipelining is live.
        grid_m = max(2, pl.cdiv(m, target))
    block_m = _round_up(pl.cdiv(m, grid_m), 8)   # sublane-aligned group-rows
    return block_m, grid_m, block_m * grid_m * group


def vecfield_forward(t, z, params):
    """Forward pass of VecField.  `t` is ignored by the module's forward."""
    del t
    (w1, b1), (w2, b2), (w3, b3), (w4, b4), betas = params
    N, D = z.shape
    H = w1.shape[0]

    # Group G samples per kernel row so G*D is a multiple of 128 (lane-dense I/O).
    G = 128 // math.gcd(D, 128)
    GD, GH = G * D, G * H

    # softplus(beta) once, host-side -> 3 SMEM scalars.
    sp = jax.nn.softplus(betas.astype(jnp.float32)).reshape(3)

    # G-way block-diagonal weight copies (built on *copies*, caller params untouched).
    # The Swish 1/1.1 scale is folded into the *next* layer's weights.
    eye = jnp.eye(G, dtype=jnp.float32)
    inv = jnp.float32(1.0 / 1.1)
    w1_bd = jnp.kron(eye, w1.astype(jnp.float32).T)          # [GD, GH]
    w2_bd = jnp.kron(eye, w2.astype(jnp.float32).T) * inv    # [GH, GH]
    w3_bd = jnp.kron(eye, w3.astype(jnp.float32).T) * inv    # [GH, GH]
    w4_bd = jnp.kron(eye, w4.astype(jnp.float32).T) * inv    # [GH, GD]

    # All biases packed into one resident (4, GH) array (fewer DMA streams).
    b_pack = jnp.zeros((4, GH), jnp.float32)
    b_pack = b_pack.at[0].set(jnp.tile(b1.astype(jnp.float32).reshape(-1), G))
    b_pack = b_pack.at[1].set(jnp.tile(b2.astype(jnp.float32).reshape(-1), G))
    b_pack = b_pack.at[2].set(jnp.tile(b3.astype(jnp.float32).reshape(-1), G))
    b_pack = b_pack.at[3, :GD].set(jnp.tile(b4.astype(jnp.float32).reshape(-1), G))

    block_m, grid_m, n_pad = _choose_tiling(N, G)
    if n_pad != N:
        z = jnp.pad(z, ((0, n_pad - N), (0, 0)))   # only a few extra rows
    x = z.reshape(n_pad // G, GD)                  # FREE reshape: no data movement

    def kernel(sp_ref, x_ref, w1_ref, w2_ref, w3_ref, w4_ref, b_ref, o_ref):
        def swish(y, sp_scalar):
            # y * sigmoid(y * softplus(beta)); sigmoid via one EUP tanh.
            # The /1.1 is already folded into the next layer's weights.
            return y * (0.5 * jnp.tanh((0.5 * sp_scalar) * y) + 0.5)

        xv = x_ref[...].astype(jnp.float32)                                # [bm, GD]
        y = jnp.dot(xv, w1_ref[...], preferred_element_type=jnp.float32) + b_ref[0:1, :]
        y = swish(y, sp_ref[0])
        y = jnp.dot(y, w2_ref[...], preferred_element_type=jnp.float32) + b_ref[1:2, :]
        y = swish(y, sp_ref[1])
        y = jnp.dot(y, w3_ref[...], preferred_element_type=jnp.float32) + b_ref[2:3, :]
        y = swish(y, sp_ref[2])
        y = jnp.dot(y, w4_ref[...], preferred_element_type=jnp.float32) + b_ref[3:4, 0:GD]
        o_ref[...] = y.astype(o_ref.dtype)                                 # lane-dense store

    out = pl.pallas_call(
        kernel,
        out_shape=jax.ShapeDtypeStruct((n_pad // G, GD), z.dtype),
        grid=(grid_m,),
        in_specs=[
            pl.BlockSpec(memory_space=pltpu.MemorySpace.SMEM),   # softplus(betas) (3,)
            pl.BlockSpec((block_m, GD), lambda i: (i, 0)),       # packed batch tile
            pl.BlockSpec((GD, GH), lambda i: (0, 0)),            # W1_bd (resident)
            pl.BlockSpec((GH, GH), lambda i: (0, 0)),            # W2_bd (resident)
            pl.BlockSpec((GH, GH), lambda i: (0, 0)),            # W3_bd (resident)
            pl.BlockSpec((GH, GD), lambda i: (0, 0)),            # W4_bd (resident)
            pl.BlockSpec((4, GH), lambda i: (0, 0)),             # packed biases
        ],
        out_specs=pl.BlockSpec((block_m, GD), lambda i: (i, 0)),
        compiler_params=pltpu.CompilerParams(
            dimension_semantics=("parallel",)),                  # batch axis -> both TCs
    )(sp, x, w1_bd, w2_bd, w3_bd, w4_bd, b_pack)

    out = out.reshape(n_pad, D)                                  # FREE reshape back
    if n_pad != N:
        out = out[:N]
    return out


def vecfield_ref(t, z, params):
    # Pure-JAX reference for correctness checking (weights are [out, in]).
    del t
    (w1, b1), (w2, b2), (w3, b3), (w4, b4), betas = params
    sp = jax.nn.softplus(betas.astype(jnp.float32))

    def swish(x, b):
        return (x * jax.nn.sigmoid(x * b)) / 1.1

    y = z.astype(jnp.float32)
    y = swish(y @ w1.T + b1, sp[0])
    y = swish(y @ w2.T + b2, sp[1])
    y = swish(y @ w3.T + b3, sp[2])
    y = y @ w4.T + b4
    return y.astype(z.dtype)


def init_params(key, input_dim, hidden_dims=(32, 32, 32)):
    # Layer (in, out) pairs exactly as VecField.__init__ builds them:
    #   Linear(input_dim, h0), Linear(h_i, h_i) for i>=1, Linear(h_last, input_dim)
    pairs = [(input_dim, hidden_dims[0])]
    pairs += [(h, h) for h in hidden_dims[1:]]
    pairs += [(hidden_dims[-1], input_dim)]

    keys = jax.random.split(key, 2 * len(pairs))
    linears = []
    for idx, (fan_in, fan_out) in enumerate(pairs):
        bound = 1.0 / (fan_in ** 0.5)   # PyTorch-style uniform init bound
        # PyTorch nn.Linear layout: weight [out, in], bias [out].
        w = jax.random.uniform(keys[2 * idx], (fan_out, fan_in),
                               jnp.float32, -bound, bound)
        b = jax.random.uniform(keys[2 * idx + 1], (fan_out,),
                               jnp.float32, -bound, bound)
        linears.append((w, b))
    # One Swish instance per hidden layer, beta initialized to 0.5.
    betas = jnp.full((len(hidden_dims),), 0.5, dtype=jnp.float32)
    return (*linears, betas)


if __name__ == "__main__":
    key = jax.random.PRNGKey(0)
    k_param, k_z1, k_z2 = jax.random.split(key, 3)

    INPUT_DIM = 16
    HIDDEN = (32, 32, 32)
    params = init_params(k_param, INPUT_DIM, HIDDEN)
    t = jnp.float32(0.0)  # unused by the forward, kept for signature parity

    # Small batch: pads to a single (8, 128) tile, grid=(1,).
    z_small = jax.random.normal(k_z1, (16, INPUT_DIM), dtype=jnp.float32)
    out_small = jax.block_until_ready(vecfield_forward(t, z_small, params))
    assert out_small.shape == z_small.shape
    assert jnp.allclose(out_small, vecfield_ref(t, z_small, params),
                        atol=1e-4, rtol=1e-4)

    # Ragged batch > 256: exercises padding to the group granularity and a
    # 2-step "parallel" grid (dual-TC path on v7x).
    z_big = jax.random.normal(k_z2, (300, INPUT_DIM), dtype=jnp.float32)
    out_big = jax.block_until_ready(vecfield_forward(t, z_big, params))
    assert out_big.shape == z_big.shape
    assert jnp.allclose(out_big, vecfield_ref(t, z_big, params),
                        atol=1e-4, rtol=1e-4)

    print("KERNEL_OK")
</pallas_src>

<mosaic_0001>
module attributes {stable_mosaic.version = 11 : i64} {
  func.func @kernel(%arg0: i32, %arg1: memref<3xf32, #tpu.memory_space<smem>>, %arg2: memref<8x128xf32, #tpu.memory_space<vmem>>, %arg3: memref<128x256xf32, #tpu.memory_space<vmem>>, %arg4: memref<256x256xf32, #tpu.memory_space<vmem>>, %arg5: memref<256x256xf32, #tpu.memory_space<vmem>>, %arg6: memref<256x128xf32, #tpu.memory_space<vmem>>, %arg7: memref<4x256xf32, #tpu.memory_space<vmem>>, %arg8: memref<8x128xf32, #tpu.memory_space<vmem>>) attributes {dimension_semantics = [#tpu.dimension_semantics<parallel>], iteration_bounds = array<i64: 1>, scalar_prefetch = 0 : i64, scratch_operands = 0 : i64, tpu.core_type = #tpu.core_type<tc>, window_params = [{transform_indices = @transform_0, window_bounds = array<i64: 3>}, {transform_indices = @transform_1, window_bounds = array<i64: 8, 128>}, {pipeline_mode = #tpu.pipeline_mode<synchronous>, transform_indices = @transform_2, window_bounds = array<i64: 128, 256>}, {pipeline_mode = #tpu.pipeline_mode<synchronous>, transform_indices = @transform_3, window_bounds = array<i64: 256, 256>}, {pipeline_mode = #tpu.pipeline_mode<synchronous>, transform_indices = @transform_4, window_bounds = array<i64: 256, 256>}, {pipeline_mode = #tpu.pipeline_mode<synchronous>, transform_indices = @transform_5, window_bounds = array<i64: 256, 128>}, {pipeline_mode = #tpu.pipeline_mode<synchronous>, transform_indices = @transform_6, window_bounds = array<i64: 4, 256>}, {transform_indices = @transform_7, window_bounds = array<i64: 8, 128>}]} {
    %c0 = arith.constant 0 : index
    %c0_0 = arith.constant 0 : index
    %0 = vector.load %arg2[%c0, %c0_0] : memref<8x128xf32, #tpu.memory_space<vmem>>, vector<8x128xf32>
    %c0_1 = arith.constant 0 : index
    %c0_2 = arith.constant 0 : index
    %1 = vector.load %arg3[%c0_1, %c0_2] : memref<128x256xf32, #tpu.memory_space<vmem>>, vector<128x256xf32>
    %cst = arith.constant dense<0.000000e+00> : vector<8x256xf32>
    %2 = tpu.matmul %0, %1, %cst {dimension_numbers = #tpu.dot_dimension_numbers<[1], [0], [0], [1], [0, 0, 1, 1], [], []>} : vector<8x128xf32>, vector<128x256xf32>, vector<8x256xf32> -> vector<8x256xf32>
    %c0_3 = arith.constant 0 : index
    %c0_4 = arith.constant 0 : index
    %3 = vector.load %arg7[%c0_3, %c0_4] : memref<4x256xf32, #tpu.memory_space<vmem>>, vector<1x256xf32>
    %4 = vector.broadcast %3 : vector<1x256xf32> to vector<8x256xf32>
    %5 = arith.addf %2, %4 : vector<8x256xf32>
    %c0_5 = arith.constant 0 : index
    %6 = memref.load %arg1[%c0_5] : memref<3xf32, #tpu.memory_space<smem>>
    %cst_6 = arith.constant 5.000000e-01 : f32
    %7 = arith.mulf %cst_6, %6 : f32
    %8 = vector.broadcast %7 : f32 to vector<8x256xf32>
    %9 = arith.mulf %8, %5 : vector<8x256xf32>
    %10 = math.tanh %9 : vector<8x256xf32>
    %cst_7 = arith.constant 5.000000e-01 : f32
    %11 = vector.broadcast %cst_7 : f32 to vector<8x256xf32>
    %12 = arith.mulf %11, %10 : vector<8x256xf32>
    %cst_8 = arith.constant 5.000000e-01 : f32
    %13 = vector.broadcast %cst_8 : f32 to vector<8x256xf32>
    %14 = arith.addf %12, %13 : vector<8x256xf32>
    %15 = arith.mulf %5, %14 : vector<8x256xf32>
    %c0_9 = arith.constant 0 : index
    %c0_10 = arith.constant 0 : index
    %16 = vector.load %arg4[%c0_9, %c0_10] : memref<256x256xf32, #tpu.memory_space<vmem>>, vector<256x256xf32>
    %cst_11 = arith.constant dense<0.000000e+00> : vector<8x256xf32>
    %17 = tpu.matmul %15, %16, %cst_11 {dimension_numbers = #tpu.dot_dimension_numbers<[1], [0], [0], [1], [0, 0, 1, 1], [], []>} : vector<8x256xf32>, vector<256x256xf32>, vector<8x256xf32> -> vector<8x256xf32>
    %c1 = arith.constant 1 : index
    %c0_12 = arith.constant 0 : index
    %18 = vector.load %arg7[%c1, %c0_12] : memref<4x256xf32, #tpu.memory_space<vmem>>, vector<1x256xf32>
    %19 = vector.broadcast %18 : vector<1x256xf32> to vector<8x256xf32>
    %20 = arith.addf %17, %19 : vector<8x256xf32>
    %c1_13 = arith.constant 1 : index
    %21 = memref.load %arg1[%c1_13] : memref<3xf32, #tpu.memory_space<smem>>
    %cst_14 = arith.constant 5.000000e-01 : f32
    %22 = arith.mulf %cst_14, %21 : f32
    %23 = vector.broadcast %22 : f32 to vector<8x256xf32>
    %24 = arith.mulf %23, %20 : vector<8x256xf32>
    %25 = math.tanh %24 : vector<8x256xf32>
    %cst_15 = arith.constant 5.000000e-01 : f32
    %26 = vector.broadcast %cst_15 : f32 to vector<8x256xf32>
    %27 = arith.mulf %26, %25 : vector<8x256xf32>
    %cst_16 = arith.constant 5.000000e-01 : f32
    %28 = vector.broadcast %cst_16 : f32 to vector<8x256xf32>
    %29 = arith.addf %27, %28 : vector<8x256xf32>
    %30 = arith.mulf %20, %29 : vector<8x256xf32>
    %c0_17 = arith.constant 0 : index
    %c0_18 = arith.constant 0 : index
    %31 = vector.load %arg5[%c0_17, %c0_18] : memref<256x256xf32, #tpu.memory_space<vmem>>, vector<256x256xf32>
    %cst_19 = arith.constant dense<0.000000e+00> : vector<8x256xf32>
    %32 = tpu.matmul %30, %31, %cst_19 {dimension_numbers = #tpu.dot_dimension_numbers<[1], [0], [0], [1], [0, 0, 1, 1], [], []>} : vector<8x256xf32>, vector<256x256xf32>, vector<8x256xf32> -> vector<8x256xf32>
    %c2 = arith.constant 2 : index
    %c0_20 = arith.constant 0 : index
    %33 = vector.load %arg7[%c2, %c0_20] : memref<4x256xf32, #tpu.memory_space<vmem>>, vector<1x256xf32>
    %34 = vector.broadcast %33 : vector<1x256xf32> to vector<8x256xf32>
    %35 = arith.addf %32, %34 : vector<8x256xf32>
    %c2_21 = arith.constant 2 : index
    %36 = memref.load %arg1[%c2_21] : memref<3xf32, #tpu.memory_space<smem>>
    %cst_22 = arith.constant 5.000000e-01 : f32
    %37 = arith.mulf %cst_22, %36 : f32
    %38 = vector.broadcast %37 : f32 to vector<8x256xf32>
    %39 = arith.mulf %38, %35 : vector<8x256xf32>
    %40 = math.tanh %39 : vector<8x256xf32>
    %cst_23 = arith.constant 5.000000e-01 : f32
    %41 = vector.broadcast %cst_23 : f32 to vector<8x256xf32>
    %42 = arith.mulf %41, %40 : vector<8x256xf32>
    %cst_24 = arith.constant 5.000000e-01 : f32
    %43 = vector.broadcast %cst_24 : f32 to vector<8x256xf32>
    %44 = arith.addf %42, %43 : vector<8x256xf32>
    %45 = arith.mulf %35, %44 : vector<8x256xf32>
    %c0_25 = arith.constant 0 : index
    %c0_26 = arith.constant 0 : index
    %46 = vector.load %arg6[%c0_25, %c0_26] : memref<256x128xf32, #tpu.memory_space<vmem>>, vector<256x128xf32>
    %cst_27 = arith.constant dense<0.000000e+00> : vector<8x128xf32>
    %47 = tpu.matmul %45, %46, %cst_27 {dimension_numbers = #tpu.dot_dimension_numbers<[1], [0], [0], [1], [0, 0, 1, 1], [], []>} : vector<8x256xf32>, vector<256x128xf32>, vector<8x128xf32> -> vector<8x128xf32>
    %c3 = arith.constant 3 : index
    %c0_28 = arith.constant 0 : index
    %48 = vector.load %arg7[%c3, %c0_28] : memref<4x256xf32, #tpu.memory_space<vmem>>, vector<1x128xf32>
    %49 = vector.broadcast %48 : vector<1x128xf32> to vector<8x128xf32>
    %50 = arith.addf %47, %49 : vector<8x128xf32>
    %c0_29 = arith.constant 0 : index
    %c0_30 = arith.constant 0 : index
    %51 = vector.load %arg8[%c0_29, %c0_30] : memref<8x128xf32, #tpu.memory_space<vmem>>, vector<8x128xf32>
    tpu.vector_store %arg8[%c0_29, %c0_30], %50 {strides = array<i32>} : memref<8x128xf32, #tpu.memory_space<vmem>>, vector<8x128xf32>,
    return
  }
  func.func @transform_0(%arg0: i32) -> i32 {
    %c0_i32 = arith.constant 0 : i32
    %c0_i32_0 = arith.constant 0 : i32
    return %c0_i32 : i32
  }
  func.func @transform_1(%arg0: i32) -> (i32, i32) {
    %c0_i32 = arith.constant 0 : i32
    %c0_i32_0 = arith.constant 0 : i32
    return %arg0, %c0_i32 : i32, i32
  }
  func.func @transform_2(%arg0: i32) -> (i32, i32) {
    %c0_i32 = arith.constant 0 : i32
    %c0_i32_0 = arith.constant 0 : i32
    %c0_i32_1 = arith.constant 0 : i32
    return %c0_i32, %c0_i32_0 : i32, i32
  }
  func.func @transform_3(%arg0: i32) -> (i32, i32) {
    %c0_i32 = arith.constant 0 : i32
    %c0_i32_0 = arith.constant 0 : i32
    %c0_i32_1 = arith.constant 0 : i32
    return %c0_i32, %c0_i32_0 : i32, i32
  }
  func.func @transform_4(%arg0: i32) -> (i32, i32) {
    %c0_i32 = arith.constant 0 : i32
    %c0_i32_0 = arith.constant 0 : i32
    %c0_i32_1 = arith.constant 0 : i32
    return %c0_i32, %c0_i32_0 : i32, i32
  }
  func.func @transform_5(%arg0: i32) -> (i32, i32) {
    %c0_i32 = arith.constant 0 : i32
    %c0_i32_0 = arith.constant 0 : i32
    %c0_i32_1 = arith.constant 0 : i32
    return %c0_i32, %c0_i32_0 : i32, i32
  }
  func.func @transform_6(%arg0: i32) -> (i32, i32) {
    %c0_i32 = arith.constant 0 : i32
    %c0_i32_0 = arith.constant 0 : i32
    %c0_i32_1 = arith.constant 0 : i32
    return %c0_i32, %c0_i32_0 : i32, i32
  }
  func.func @transform_7(%arg0: i32) -> (i32, i32) {
    %c0_i32 = arith.constant 0 : i32
    %c0_i32_0 = arith.constant 0 : i32
    return %arg0, %c0_i32 : i32, i32
  }
}

</mosaic_0001>

<llo_original>
// kernel: tpu_custom_call.1
$region0: #{tpu_custom_call.1}
  #allocation0 [shape = 'u32[]', space=smem, size = 0x4, offset = 0x4, fixed_abs, tag = 'smem constant byte address 0x4 - core index']
  #allocation1 [shape = 'u32[144,128]{1,0:T(1,128)}', space=vmem, size = 0x12000, scoped, tag = 'internal scratch']
  %s0 = inlined_call_operand.hbm [shape: f32[3], index: 0, kind: input, shape index: {}]
  %s1 = inlined_call_operand.hbm [shape: f32[8,128], index: 1, kind: input, shape index: {}]
  %s2 = inlined_call_operand.hbm [shape: f32[128,256], index: 2, kind: input, shape index: {}]
  %s3 = inlined_call_operand.hbm [shape: f32[256,256], index: 3, kind: input, shape index: {}]
  %s4 = inlined_call_operand.hbm [shape: f32[256,256], index: 4, kind: input, shape index: {}]
  %s5 = inlined_call_operand.hbm [shape: f32[256,128], index: 5, kind: input, shape index: {}]
  %s6 = inlined_call_operand.vmem [shape: f32[4,256], index: 6, kind: input, shape index: {}]
  %s7 = inlined_call_operand.hbm [shape: f32[8,128], index: 7, kind: output, shape index: {}]
  %s8 = sld [smem:[#allocation0]]
  $region62: #{tpu_custom_call.1} parent=0
    _
  %s10 = ssub.s32 1, %s8
  %s11 = scalar_select 0, %s10, %s8
  $region1: #{tpu_custom_call.1} parent=0
    #allocation2 [shape = 'u8[512]{0}', space=smem, size = 0x200, scoped, tag = 'input window, operand 0, single buffered']
    #allocation3 [shape = 's32[1]{0}', space=sflag, size = 0x4, scoped, tag = 'scoped memory for tpu_custom_call.1']
    #allocation4 [shape = 's32[1]{0}', space=sflag, size = 0x4, scoped, tag = 'scoped memory for tpu_custom_call.1']
    #allocation5 [shape = 's32[1]{0}', space=sflag, size = 0x4, scoped, tag = 'scoped memory for tpu_custom_call.1']
    #allocation6 [shape = 'u8[4096]{0}', space=vmem, size = 0x1000, scoped, tag = 'input window, operand 1, single buffered']
    #allocation7 [shape = 'u8[131072]{0}', space=vmem, size = 0x20000, scoped, tag = 'input window, operand 2, single buffered']
    #allocation8 [shape = 's32[1]{0}', space=sflag, size = 0x4, scoped, tag = 'scoped memory for tpu_custom_call.1']
    #allocation9 [shape = 'u8[262144]{0}', space=vmem, size = 0x40000, scoped, tag = 'input window, operand 3, single buffered']
    #allocation10 [shape = 'u8[262144]{0}', space=vmem, size = 0x40000, scoped, tag = 'input window, operand 4, single buffered']
    #allocation11 [shape = 's32[1]{0}', space=sflag, size = 0x4, scoped, tag = 'scoped memory for tpu_custom_call.1']
    #allocation12 [shape = 'u8[131072]{0}', space=vmem, size = 0x20000, scoped, tag = 'input window, operand 5, single buffered']
    #allocation13 [shape = 'u8[4096]{0}', space=vmem, size = 0x1000, scoped, tag = 'output window, operand 0, single buffered']
    %12 = vsyncpa [#allocation5], 0
    %13 = vsyncpa [#allocation3], 0
    %14 = vsyncpa [#allocation8], 0
    %15 = vsyncpa [#allocation11], 0
    %16 = vsyncpa [#allocation4], 0
    // Predicated region
    $region2: #{tpu_custom_call.1} parent=1 // pred_check
      _
    $region3: #{tpu_custom_call.1} parent=1 // pred_check_branch
      %18 = sbr.rel (0) target = $region5
    $region4: #{tpu_custom_call.1} parent=1 // pred_region
      %s20 = ssub.s32 16, 16
      %21 = vsyncadd [#allocation5], %s20
      %24 = dma.hbm_to_smem %s0, 16, [#allocation2], [#allocation5]
    $region5: #{tpu_custom_call.1} parent=1 // pred_fallthru
      _
    // Predicated region
    $region6: #{tpu_custom_call.1} parent=1 // pred_check
      _
    $region7: #{tpu_custom_call.1} parent=1 // pred_check_branch
      %26 = sbr.rel (0) target = $region9
    $region8: #{tpu_custom_call.1} parent=1 // pred_region
      %s28 = ssub.s32 128, 128
      %29 = vsyncadd [#allocation3], %s28
      %s31 = sshll.u32 [#allocation6], 4
      %s32 = int_to_ptr.vmem [resolvable:$true] %s31
      %34 = dma.hbm_to_vmem [thread:$0]  %s1, 128, %s32, [#allocation3]
    $region9: #{tpu_custom_call.1} parent=1 // pred_fallthru
      _
    // Predicated region
    $region10: #{tpu_custom_call.1} parent=1 // pred_check
      _
    $region11: #{tpu_custom_call.1} parent=1 // pred_check_branch
      %36 = sbr.rel (0) target = $region13
    $region12: #{tpu_custom_call.1} parent=1 // pred_region
      %s38 = ssub.s32 4096, 4096
      %39 = vsyncadd [#allocation8], %s38
      %s40 = sshll.u32 [#allocation7], 4
      %s41 = int_to_ptr.vmem [resolvable:$true] %s40
      %46 = dma.hbm_to_vmem [thread:$0]  %s2, 4096, %s41, [#allocation8], 256, 256, 16
    $region13: #{tpu_custom_call.1} parent=1 // pred_fallthru
      _
    // Predicated region
    $region14: #{tpu_custom_call.1} parent=1 // pred_check
      _
    $region15: #{tpu_custom_call.1} parent=1 // pred_check_branch
      %48 = sbr.rel (0) target = $region17
    $region16: #{tpu_custom_call.1} parent=1 // pred_region
      %s50 = ssub.s32 8192, 8192
      %51 = vsyncadd [#allocation8], %s50
      %s52 = sshll.u32 [#allocation9], 4
      %s53 = int_to_ptr.vmem [resolvable:$true] %s52
      %58 = dma.hbm_to_vmem [thread:$0]  %s3, 8192, %s53, [#allocation8], 256, 256, 16
    $region17: #{tpu_custom_call.1} parent=1 // pred_fallthru
      _
    // Predicated region
    $region18: #{tpu_custom_call.1} parent=1 // pred_check
      _
    $region19: #{tpu_custom_call.1} parent=1 // pred_check_branch
      %60 = sbr.rel (0) target = $region21
    $region20: #{tpu_custom_call.1} parent=1 // pred_region
      %s62 = ssub.s32 8192, 8192
      %63 = vsyncadd [#allocation11], %s62
      %s64 = sshll.u32 [#allocation10], 4
      %s65 = int_to_ptr.vmem [resolvable:$true] %s64
      %70 = dma.hbm_to_vmem [thread:$0]  %s4, 8192, %s65, [#allocation11], 256, 256, 16
    $region21: #{tpu_custom_call.1} parent=1 // pred_fallthru
      _
    // Predicated region
    $region22: #{tpu_custom_call.1} parent=1 // pred_check
      _
    $region23: #{tpu_custom_call.1} parent=1 // pred_check_branch
      %72 = sbr.rel (0) target = $region25
    $region24: #{tpu_custom_call.1} parent=1 // pred_region
      %s74 = ssub.s32 4096, 4096
      %75 = vsyncadd [#allocation11], %s74
      %s76 = sshll.u32 [#allocation12], 4
      %s77 = int_to_ptr.vmem [resolvable:$true] %s76
      %82 = dma.hbm_to_vmem [thread:$0]  %s5, 4096, %s77, [#allocation11], 128, 128, 8
    $region25: #{tpu_custom_call.1} parent=1 // pred_fallthru
      _
    // Predicated region
    $region26: #{tpu_custom_call.1} parent=1 // pred_check
      _
    $region27: #{tpu_custom_call.1} parent=1 // pred_check_branch
      %84 = sbr.rel (0) target = $region29
    $region28: #{tpu_custom_call.1} parent=1 // pred_region
      _
    $region29: #{tpu_custom_call.1} parent=1 // pred_fallthru
      _
    // Predicated region
    $region30: #{tpu_custom_call.1} parent=1 // pred_check
      _
    $region31: #{tpu_custom_call.1} parent=1 // pred_check_branch
      %86 = sbr.rel (0) target = $region33
    $region32: #{tpu_custom_call.1} parent=1 // pred_region
      %87 = dma.done [#allocation5], 16
    $region33: #{tpu_custom_call.1} parent=1 // pred_fallthru
      _
    // Predicated region
    $region34: #{tpu_custom_call.1} parent=1 // pred_check
      _
    $region35: #{tpu_custom_call.1} parent=1 // pred_check_branch
      %89 = sbr.rel (0) target = $region37
    $region36: #{tpu_custom_call.1} parent=1 // pred_region
      %90 = dma.done [#allocation3], 128
    $region37: #{tpu_custom_call.1} parent=1 // pred_fallthru
      _
    // Predicated region
    $region38: #{tpu_custom_call.1} parent=1 // pred_check
      _
    $region39: #{tpu_custom_call.1} parent=1 // pred_check_branch
      %92 = sbr.rel (0) target = $region41
    $region40: #{tpu_custom_call.1} parent=1 // pred_region
      %93 = dma.done [#allocation8], 4096
    $region41: #{tpu_custom_call.1} parent=1 // pred_fallthru
      _
    // Predicated region
    $region42: #{tpu_custom_call.1} parent=1 // pred_check
      _
    $region43: #{tpu_custom_call.1} parent=1 // pred_check_branch
      %95 = sbr.rel (0) target = $region45
    $region44: #{tpu_custom_call.1} parent=1 // pred_region
      %96 = dma.done [#allocation8], 8192
    $region45: #{tpu_custom_call.1} parent=1 // pred_fallthru
      _
    // Predicated region
    $region46: #{tpu_custom_call.1} parent=1 // pred_check
      _
    $region47: #{tpu_custom_call.1} parent=1 // pred_check_branch
      %98 = sbr.rel (0) target = $region49
    $region48: #{tpu_custom_call.1} parent=1 // pred_region
      %99 = dma.done [#allocation11], 8192
    $region49: #{tpu_custom_call.1} parent=1 // pred_fallthru
      _
    // Predicated region
    $region50: #{tpu_custom_call.1} parent=1 // pred_check
      _
    $region51: #{tpu_custom_call.1} parent=1 // pred_check_branch
      %101 = sbr.rel (0) target = $region53
    $region52: #{tpu_custom_call.1} parent=1 // pred_region
      %102 = dma.done [#allocation11], 4096
    $region53: #{tpu_custom_call.1} parent=1 // pred_fallthru
      _
    %103 = sfence
    %v104 = vld [vmem:[#allocation6] sm:$0xff]
    %v105 = vld [vmem:[#allocation7] sm:$0xff]
    %v106 = vld [vmem:[#allocation7 + $0x8] sm:$0xff]
    %v107 = vld [vmem:[#allocation7 + $0x10] sm:$0xff]
    %v108 = vld [vmem:[#allocation7 + $0x18] sm:$0xff]
    %v109 = vld [vmem:[#allocation7 + $0x20] sm:$0xff]
    %v110 = vld [vmem:[#allocation7 + $0x28] sm:$0xff]
    %v111 = vld [vmem:[#allocation7 + $0x30] sm:$0xff]
    %v112 = vld [vmem:[#allocation7 + $0x38] sm:$0xff]
    %v113 = vld [vmem:[#allocation7 + $0x40] sm:$0xff]
    %v114 = vld [vmem:[#allocation7 + $0x48] sm:$0xff]
    %v115 = vld [vmem:[#allocation7 + $0x50] sm:$0xff]
    %v116 = vld [vmem:[#allocation7 + $0x58] sm:$0xff]
    %v117 = vld [vmem:[#allocation7 + $0x60] sm:$0xff]
    %v118 = vld [vmem:[#allocation7 + $0x68] sm:$0xff]
    %v119 = vld [vmem:[#allocation7 + $0x70] sm:$0xff]
    %v120 = vld [vmem:[#allocation7 + $0x78] sm:$0xff]
    %v121 = vld [vmem:[#allocation7 + $0x80] sm:$0xff]
    %v122 = vld [vmem:[#allocation7 + $0x88] sm:$0xff]
    %v123 = vld [vmem:[#allocation7 + $0x90] sm:$0xff]
    %v124 = vld [vmem:[#allocation7 + $0x98] sm:$0xff]
    %v125 = vld [vmem:[#allocation7 + $0xa0] sm:$0xff]
    %v126 = vld [vmem:[#allocation7 + $0xa8] sm:$0xff]
    %v127 = vld [vmem:[#allocation7 + $0xb0] sm:$0xff]
    %v128 = vld [vmem:[#allocation7 + $0xb8] sm:$0xff]
    %v129 = vld [vmem:[#allocation7 + $0xc0] sm:$0xff]
    %v130 = vld [vmem:[#allocation7 + $0xc8] sm:$0xff]
    %v131 = vld [vmem:[#allocation7 + $0xd0] sm:$0xff]
    %v132 = vld [vmem:[#allocation7 + $0xd8] sm:$0xff]
    %v133 = vld [vmem:[#allocation7 + $0xe0] sm:$0xff]
    %v134 = vld [vmem:[#allocation7 + $0xe8] sm:$0xff]
    %v135 = vld [vmem:[#allocation7 + $0xf0] sm:$0xff]
    %v136 = vld [vmem:[#allocation7 + $0xf8] sm:$0xff]
    %v137 = vld [vmem:[%s6] ss:$4 sm:$0x3]
    %v139 = vlaneseq
    %v140 = vshrl.u32 %v139, 7
    %v141 = vsub.s32 0, %v140
    %v142 = vrot.slane %v137, %v141
    %v143 = vlaneseq
    %v144 = vshrl.u32 %v143, 7
    %v145 = vsub.s32 1, %v144
    %v146 = vrot.slane %v137, %v145
    %149 = vmatprep.subr.mxu0 %v106
    %150 = vmatpush1.msra.mxu0 %v105
    %151 = vmatprep.subr.mxu0 %v108
    %152 = vmatpush1.msra.mxu0 %v107
    %153 = vmatprep.subr.mxu0 %v110
    %154 = vmatpush1.msra.mxu0 %v109
    %155 = vmatprep.subr.mxu0 %v112
    %156 = vmatpush1.msra.mxu0 %v111
    %157 = vmatprep.subr.mxu0 %v114
    %158 = vmatpush1.msra.mxu0 %v113
    %159 = vmatprep.subr.mxu0 %v116
    %160 = vmatpush1.msra.mxu0 %v115
    %161 = vmatprep.subr.mxu0 %v118
    %162 = vmatpush1.msra.mxu0 %v117
    %163 = vmatprep.subr.mxu0 %v120
    %164 = vmatpush1.msra.mxu0 %v119
    %165 = vmatprep.subr.mxu0 %v122
    %166 = vmatpush1.msra.mxu0 %v121
    %167 = vmatprep.subr.mxu0 %v124
    %168 = vmatpush1.msra.mxu0 %v123
    %169 = vmatprep.subr.mxu0 %v126
    %170 = vmatpush1.msra.mxu0 %v125
    %171 = vmatprep.subr.mxu0 %v128
    %172 = vmatpush1.msra.mxu0 %v127
    %173 = vmatprep.subr.mxu0 %v130
    %174 = vmatpush1.msra.mxu0 %v129
    %175 = vmatprep.subr.mxu0 %v132
    %176 = vmatpush1.msra.mxu0 %v131
    %177 = vmatprep.subr.mxu0 %v134
    %178 = vmatpush1.msra.mxu0 %v133
    %179 = vmatprep.subr.mxu0 %v136
    %180 = vmatpush1.msra.mxu0 %v135
    %181 = vmatprep.subr.mxu0 0.0
    %182 = vmatpush1.msra.mxu0 0.0
    %183 = vmatprep.subr.mxu0 0.0
    %184 = vmatpush1.msra.mxu0 0.0
    %185 = vmatprep.subr.mxu0 0.0
    %186 = vmatpush1.msra.mxu0 0.0
    %187 = vmatprep.subr.mxu0 0.0
    %188 = vmatpush1.msra.mxu0 0.0
    %189 = vmatprep.subr.mxu0 0.0
    %190 = vmatpush1.msra.mxu0 0.0
    %191 = vmatprep.subr.mxu0 0.0
    %192 = vmatpush1.msra.mxu0 0.0
    %193 = vmatprep.subr.mxu0 0.0
    %194 = vmatpush1.msra.mxu0 0.0
    %195 = vmatprep.subr.mxu0 0.0
    %196 = vmatpush1.msra.mxu0 0.0
    %197 = vmatprep.subr.mxu0 0.0
    %198 = vmatpush1.msra.mxu0 0.0
    %199 = vmatprep.subr.mxu0 0.0
    %200 = vmatpush1.msra.mxu0 0.0
    %201 = vmatprep.subr.mxu0 0.0
    %202 = vmatpush1.msra.mxu0 0.0
    %203 = vmatprep.subr.mxu0 0.0
    %204 = vmatpush1.msra.mxu0 0.0
    %205 = vmatprep.subr.mxu0 0.0
    %206 = vmatpush1.msra.mxu0 0.0
    %207 = vmatprep.subr.mxu0 0.0
    %208 = vmatpush1.msra.mxu0 0.0
    %209 = vmatprep.subr.mxu0 0.0
    %210 = vmatpush1.msra.mxu0 0.0
    %211 = vmatprep.subr.mxu0 0.0
    %212 = vmatpush1.msra.mxu0 0.0
    %213 = vmatprep.mubr.f32.mxu0 0.0
    %214 = vmatmul.mubr.f32.gmra.mrb[0].mxu0 %v104
    %v215 = vpop.f32.mrb[0].mxu0
    %v216 = vadd.f32 %v142, %v215
    %v217 = vpop.f32.mrb[0].mxu0
    %v218 = vadd.f32 %v146, %v217
    %219 = vdwg.mxu0
    %s220 = sld [smem:[#allocation2]]
    %s221 = smul.f32 %s220, 0.5
    %v222 = vstv %s221
    %v223 = vmul.f32 %v222, %v216
    %v224 = vmul.f32 %v222, %v218
    %v225 = vtanh.pop %v223
    %v226 = vtanh.pop %v224
    %v227 = vmul.f32 %v225, 0.5
    %v228 = vmul.f32 %v226, 0.5
    %v229 = vadd.f32 %v227, 0.5
    %v230 = vadd.f32 %v228, 0.5
    %v231 = vmul.f32 %v216, %v229
    %v232 = vmul.f32 %v218, %v230
    %v233 = vld [vmem:[#allocation9] sm:$0xff]
    %v234 = vld [vmem:[#allocation9 + $0x8] sm:$0xff]
    %v235 = vld [vmem:[#allocation9 + $0x10] sm:$0xff]
    %v236 = vld [vmem:[#allocation9 + $0x18] sm:$0xff]
    %v237 = vld [vmem:[#allocation9 + $0x20] sm:$0xff]
    %v238 = vld [vmem:[#allocation9 + $0x28] sm:$0xff]
    %v239 = vld [vmem:[#allocation9 + $0x30] sm:$0xff]
    %v240 = vld [vmem:[#allocation9 + $0x38] sm:$0xff]
    %v241 = vld [vmem:[#allocation9 + $0x40] sm:$0xff]
    %v242 = vld [vmem:[#allocation9 + $0x48] sm:$0xff]
    %v243 = vld [vmem:[#allocation9 + $0x50] sm:$0xff]
    %v244 = vld [vmem:[#allocation9 + $0x58] sm:$0xff]
    %v245 = vld [vmem:[#allocation9 + $0x60] sm:$0xff]
    %v246 = vld [vmem:[#allocation9 + $0x68] sm:$0xff]
    %v247 = vld [vmem:[#allocation9 + $0x70] sm:$0xff]
    %v248 = vld [vmem:[#allocation9 + $0x78] sm:$0xff]
    %v249 = vld [vmem:[#allocation9 + $0x80] sm:$0xff]
    %v250 = vld [vmem:[#allocation9 + $0x88] sm:$0xff]
    %v251 = vld [vmem:[#allocation9 + $0x90] sm:$0xff]
    %v252 = vld [vmem:[#allocation9 + $0x98] sm:$0xff]
    %v253 = vld [vmem:[#allocation9 + $0xa0] sm:$0xff]
    %v254 = vld [vmem:[#allocation9 + $0xa8] sm:$0xff]
    %v255 = vld [vmem:[#allocation9 + $0xb0] sm:$0xff]
    %v256 = vld [vmem:[#allocation9 + $0xb8] sm:$0xff]
    %v257 = vld [vmem:[#allocation9 + $0xc0] sm:$0xff]
    %v258 = vld [vmem:[#allocation9 + $0xc8] sm:$0xff]
    %v259 = vld [vmem:[#allocation9 + $0xd0] sm:$0xff]
    %v260 = vld [vmem:[#allocation9 + $0xd8] sm:$0xff]
    %v261 = vld [vmem:[#allocation9 + $0xe0] sm:$0xff]
    %v262 = vld [vmem:[#allocation9 + $0xe8] sm:$0xff]
    %v263 = vld [vmem:[#allocation9 + $0xf0] sm:$0xff]
    %v264 = vld [vmem:[#allocation9 + $0xf8] sm:$0xff]
    %v265 = vld [vmem:[#allocation9 + $0x100] sm:$0xff]
    %v266 = vld [vmem:[#allocation9 + $0x108] sm:$0xff]
    %v267 = vld [vmem:[#allocation9 + $0x110] sm:$0xff]
    %v268 = vld [vmem:[#allocation9 + $0x118] sm:$0xff]
    %v269 = vld [vmem:[#allocation9 + $0x120] sm:$0xff]
    %v270 = vld [vmem:[#allocation9 + $0x128] sm:$0xff]
    %v271 = vld [vmem:[#allocation9 + $0x130] sm:$0xff]
    %v272 = vld [vmem:[#allocation9 + $0x138] sm:$0xff]
    %v273 = vld [vmem:[#allocation9 + $0x140] sm:$0xff]
    %v274 = vld [vmem:[#allocation9 + $0x148] sm:$0xff]
    %v275 = vld [vmem:[#allocation9 + $0x150] sm:$0xff]
    %v276 = vld [vmem:[#allocation9 + $0x158] sm:$0xff]
    %v277 = vld [vmem:[#allocation9 + $0x160] sm:$0xff]
    %v278 = vld [vmem:[#allocation9 + $0x168] sm:$0xff]
    %v279 = vld [vmem:[#allocation9 + $0x170] sm:$0xff]
    %v280 = vld [vmem:[#allocation9 + $0x178] sm:$0xff]
    %v281 = vld [vmem:[#allocation9 + $0x180] sm:$0xff]
    %v282 = vld [vmem:[#allocation9 + $0x188] sm:$0xff]
    %v283 = vld [vmem:[#allocation9 + $0x190] sm:$0xff]
    %v284 = vld [vmem:[#allocation9 + $0x198] sm:$0xff]
    %v285 = vld [vmem:[#allocation9 + $0x1a0] sm:$0xff]
    %v286 = vld [vmem:[#allocation9 + $0x1a8] sm:$0xff]
    %v287 = vld [vmem:[#allocation9 + $0x1b0] sm:$0xff]
    %v288 = vld [vmem:[#allocation9 + $0x1b8] sm:$0xff]
    %v289 = vld [vmem:[#allocation9 + $0x1c0] sm:$0xff]
    %v290 = vld [vmem:[#allocation9 + $0x1c8] sm:$0xff]
    %v291 = vld [vmem:[#allocation9 + $0x1d0] sm:$0xff]
    %v292 = vld [vmem:[#allocation9 + $0x1d8] sm:$0xff]
    %v293 = vld [vmem:[#allocation9 + $0x1e0] sm:$0xff]
    %v294 = vld [vmem:[#allocation9 + $0x1e8] sm:$0xff]
    %v295 = vld [vmem:[#allocation9 + $0x1f0] sm:$0xff]
    %v296 = vld [vmem:[#allocation9 + $0x1f8] sm:$0xff]
    %s297 = scalar_lea.vmem %s6, 1
    %v298 = vld [vmem:[%s297] ss:$4 sm:$0x3]
    %v300 = vlaneseq
    %v301 = vshrl.u32 %v300, 7
    %v302 = vsub.s32 0, %v301
    %v303 = vrot.slane %v298, %v302
    %v304 = vlaneseq
    %v305 = vshrl.u32 %v304, 7
    %v306 = vsub.s32 1, %v305
    %v307 = vrot.slane %v298, %v306
    %310 = vmatprep.subr.mxu0 %v234
    %311 = vmatpush1.msra.mxu0 %v233
    %312 = vmatprep.subr.mxu0 %v236
    %313 = vmatpush1.msra.mxu0 %v235
    %314 = vmatprep.subr.mxu0 %v238
    %315 = vmatpush1.msra.mxu0 %v237
    %316 = vmatprep.subr.mxu0 %v240
    %317 = vmatpush1.msra.mxu0 %v239
    %318 = vmatprep.subr.mxu0 %v242
    %319 = vmatpush1.msra.mxu0 %v241
    %320 = vmatprep.subr.mxu0 %v244
    %321 = vmatpush1.msra.mxu0 %v243
    %322 = vmatprep.subr.mxu0 %v246
    %323 = vmatpush1.msra.mxu0 %v245
    %324 = vmatprep.subr.mxu0 %v248
    %325 = vmatpush1.msra.mxu0 %v247
    %326 = vmatprep.subr.mxu0 %v250
    %327 = vmatpush1.msra.mxu0 %v249
    %328 = vmatprep.subr.mxu0 %v252
    %329 = vmatpush1.msra.mxu0 %v251
    %330 = vmatprep.subr.mxu0 %v254
    %331 = vmatpush1.msra.mxu0 %v253
    %332 = vmatprep.subr.mxu0 %v256
    %333 = vmatpush1.msra.mxu0 %v255
    %334 = vmatprep.subr.mxu0 %v258
    %335 = vmatpush1.msra.mxu0 %v257
    %336 = vmatprep.subr.mxu0 %v260
    %337 = vmatpush1.msra.mxu0 %v259
    %338 = vmatprep.subr.mxu0 %v262
    %339 = vmatpush1.msra.mxu0 %v261
    %340 = vmatprep.subr.mxu0 %v264
    %341 = vmatpush1.msra.mxu0 %v263
    %342 = vmatprep.subr.mxu0 %v266
    %343 = vmatpush1.msra.mxu0 %v265
    %344 = vmatprep.subr.mxu0 %v268
    %345 = vmatpush1.msra.mxu0 %v267
    %346 = vmatprep.subr.mxu0 %v270
    %347 = vmatpush1.msra.mxu0 %v269
    %348 = vmatprep.subr.mxu0 %v272
    %349 = vmatpush1.msra.mxu0 %v271
    %350 = vmatprep.subr.mxu0 %v274
    %351 = vmatpush1.msra.mxu0 %v273
    %352 = vmatprep.subr.mxu0 %v276
    %353 = vmatpush1.msra.mxu0 %v275
    %354 = vmatprep.subr.mxu0 %v278
    %355 = vmatpush1.msra.mxu0 %v277
    %356 = vmatprep.subr.mxu0 %v280
    %357 = vmatpush1.msra.mxu0 %v279
    %358 = vmatprep.subr.mxu0 %v282
    %359 = vmatpush1.msra.mxu0 %v281
    %360 = vmatprep.subr.mxu0 %v284
    %361 = vmatpush1.msra.mxu0 %v283
    %362 = vmatprep.subr.mxu0 %v286
    %363 = vmatpush1.msra.mxu0 %v285
    %364 = vmatprep.subr.mxu0 %v288
    %365 = vmatpush1.msra.mxu0 %v287
    %366 = vmatprep.subr.mxu0 %v290
    %367 = vmatpush1.msra.mxu0 %v289
    %368 = vmatprep.subr.mxu0 %v292
    %369 = vmatpush1.msra.mxu0 %v291
    %370 = vmatprep.subr.mxu0 %v294
    %371 = vmatpush1.msra.mxu0 %v293
    %372 = vmatprep.subr.mxu0 %v296
    %373 = vmatpush1.msra.mxu0 %v295
    %374 = vmatprep.mubr.f32.mxu0 %v232
    %375 = vmatmul.mubr.f32.gmra.mrb[0].mxu0 %v231
    %v376 = vpop.f32.mrb[0].mxu0
    %v377 = vadd.f32 %v303, %v376
    %v378 = vpop.f32.mrb[0].mxu0
    %v379 = vadd.f32 %v307, %v378
    %380 = vdwg.mxu0
    %s381 = sld [smem:[#allocation2 + $0x1]]
    %s382 = smul.f32 %s381, 0.5
    %v383 = vstv %s382
    %v384 = vmul.f32 %v383, %v377
    %v385 = vmul.f32 %v383, %v379
    %v386 = vtanh.pop %v384
    %v387 = vtanh.pop %v385
    %v388 = vmul.f32 %v386, 0.5
    %v389 = vmul.f32 %v387, 0.5
    %v390 = vadd.f32 %v388, 0.5
    %v391 = vadd.f32 %v389, 0.5
    %v392 = vmul.f32 %v377, %v390
    %v393 = vmul.f32 %v379, %v391
    %v394 = vld [vmem:[#allocation10] sm:$0xff]
    %v395 = vld [vmem:[#allocation10 + $0x8] sm:$0xff]
    %v396 = vld [vmem:[#allocation10 + $0x10] sm:$0xff]
    %v397 = vld [vmem:[#allocation10 + $0x18] sm:$0xff]
    %v398 = vld [vmem:[#allocation10 + $0x20] sm:$0xff]
    %v399 = vld [vmem:[#allocation10 + $0x28] sm:$0xff]
    %v400 = vld [vmem:[#allocation10 + $0x30] sm:$0xff]
    %v401 = vld [vmem:[#allocation10 + $0x38] sm:$0xff]
    %v402 = vld [vmem:[#allocation10 + $0x40] sm:$0xff]
    %v403 = vld [vmem:[#allocation10 + $0x48] sm:$0xff]
    %v404 = vld [vmem:[#allocation10 + $0x50] sm:$0xff]
    %v405 = vld [vmem:[#allocation10 + $0x58] sm:$0xff]
    %v406 = vld [vmem:[#allocation10 + $0x60] sm:$0xff]
    %v407 = vld [vmem:[#allocation10 + $0x68] sm:$0xff]
    %v408 = vld [vmem:[#allocation10 + $0x70] sm:$0xff]
    %v409 = vld [vmem:[#allocation10 + $0x78] sm:$0xff]
    %v410 = vld [vmem:[#allocation10 + $0x80] sm:$0xff]
    %v411 = vld [vmem:[#allocation10 + $0x88] sm:$0xff]
    %v412 = vld [vmem:[#allocation10 + $0x90] sm:$0xff]
    %v413 = vld [vmem:[#allocation10 + $0x98] sm:$0xff]
    %v414 = vld [vmem:[#allocation10 + $0xa0] sm:$0xff]
    %v415 = vld [vmem:[#allocation10 + $0xa8] sm:$0xff]
    %v416 = vld [vmem:[#allocation10 + $0xb0] sm:$0xff]
    %v417 = vld [vmem:[#allocation10 + $0xb8] sm:$0xff]
    %v418 = vld [vmem:[#allocation10 + $0xc0] sm:$0xff]
    %v419 = vld [vmem:[#allocation10 + $0xc8] sm:$0xff]
    %v420 = vld [vmem:[#allocation10 + $0xd0] sm:$0xff]
    %v421 = vld [vmem:[#allocation10 + $0xd8] sm:$0xff]
    %v422 = vld [vmem:[#allocation10 + $0xe0] sm:$0xff]
    %v423 = vld [vmem:[#allocation10 + $0xe8] sm:$0xff]
    %v424 = vld [vmem:[#allocation10 + $0xf0] sm:$0xff]
    %v425 = vld [vmem:[#allocation10 + $0xf8] sm:$0xff]
    %v426 = vld [vmem:[#allocation10 + $0x100] sm:$0xff]
    %v427 = vld [vmem:[#allocation10 + $0x108] sm:$0xff]
    %v428 = vld [vmem:[#allocation10 + $0x110] sm:$0xff]
    %v429 = vld [vmem:[#allocation10 + $0x118] sm:$0xff]
    %v430 = vld [vmem:[#allocation10 + $0x120] sm:$0xff]
    %v431 = vld [vmem:[#allocation10 + $0x128] sm:$0xff]
    %v432 = vld [vmem:[#allocation10 + $0x130] sm:$0xff]
    %v433 = vld [vmem:[#allocation10 + $0x138] sm:$0xff]
    %v434 = vld [vmem:[#allocation10 + $0x140] sm:$0xff]
    %v435 = vld [vmem:[#allocation10 + $0x148] sm:$0xff]
    %v436 = vld [vmem:[#allocation10 + $0x150] sm:$0xff]
    %v437 = vld [vmem:[#allocation10 + $0x158] sm:$0xff]
    %v438 = vld [vmem:[#allocation10 + $0x160] sm:$0xff]
    %v439 = vld [vmem:[#allocation10 + $0x168] sm:$0xff]
    %v440 = vld [vmem:[#allocation10 + $0x170] sm:$0xff]
    %v441 = vld [vmem:[#allocation10 + $0x178] sm:$0xff]
    %v442 = vld [vmem:[#allocation10 + $0x180] sm:$0xff]
    %v443 = vld [vmem:[#allocation10 + $0x188] sm:$0xff]
    %v444 = vld [vmem:[#allocation10 + $0x190] sm:$0xff]
    %v445 = vld [vmem:[#allocation10 + $0x198] sm:$0xff]
    %v446 = vld [vmem:[#allocation10 + $0x1a0] sm:$0xff]
    %v447 = vld [vmem:[#allocation10 + $0x1a8] sm:$0xff]
    %v448 = vld [vmem:[#allocation10 + $0x1b0] sm:$0xff]
    %v449 = vld [vmem:[#allocation10 + $0x1b8] sm:$0xff]
    %v450 = vld [vmem:[#allocation10 + $0x1c0] sm:$0xff]
    %v451 = vld [vmem:[#allocation10 + $0x1c8] sm:$0xff]
    %v452 = vld [vmem:[#allocation10 + $0x1d0] sm:$0xff]
    %v453 = vld [vmem:[#allocation10 + $0x1d8] sm:$0xff]
    %v454 = vld [vmem:[#allocation10 + $0x1e0] sm:$0xff]
    %v455 = vld [vmem:[#allocation10 + $0x1e8] sm:$0xff]
    %v456 = vld [vmem:[#allocation10 + $0x1f0] sm:$0xff]
    %v457 = vld [vmem:[#allocation10 + $0x1f8] sm:$0xff]
    %s458 = scalar_lea.vmem %s6, 2
    %v459 = vld [vmem:[%s458] ss:$4 sm:$0x3]
    %v461 = vlaneseq
    %v462 = vshrl.u32 %v461, 7
    %v463 = vsub.s32 0, %v462
    %v464 = vrot.slane %v459, %v463
    %v465 = vlaneseq
    %v466 = vshrl.u32 %v465, 7
    %v467 = vsub.s32 1, %v466
    %v468 = vrot.slane %v459, %v467
    %471 = vmatprep.subr.mxu0 %v395
    %472 = vmatpush1.msra.mxu0 %v394
    %473 = vmatprep.subr.mxu0 %v397
    %474 = vmatpush1.msra.mxu0 %v396
    %475 = vmatprep.subr.mxu0 %v399
    %476 = vmatpush1.msra.mxu0 %v398
    %477 = vmatprep.subr.mxu0 %v401
    %478 = vmatpush1.msra.mxu0 %v400
    %479 = vmatprep.subr.mxu0 %v403
    %480 = vmatpush1.msra.mxu0 %v402
    %481 = vmatprep.subr.mxu0 %v405
    %482 = vmatpush1.msra.mxu0 %v404
    %483 = vmatprep.subr.mxu0 %v407
    %484 = vmatpush1.msra.mxu0 %v406
    %485 = vmatprep.subr.mxu0 %v409
    %486 = vmatpush1.msra.mxu0 %v408
    %487 = vmatprep.subr.mxu0 %v411
    %488 = vmatpush1.msra.mxu0 %v410
    %489 = vmatprep.subr.mxu0 %v413
    %490 = vmatpush1.msra.mxu0 %v412
    %491 = vmatprep.subr.mxu0 %v415
    %492 = vmatpush1.msra.mxu0 %v414
    %493 = vmatprep.subr.mxu0 %v417
    %494 = vmatpush1.msra.mxu0 %v416
    %495 = vmatprep.subr.mxu0 %v419
    %496 = vmatpush1.msra.mxu0 %v418
    %497 = vmatprep.subr.mxu0 %v421
    %498 = vmatpush1.msra.mxu0 %v420
    %499 = vmatprep.subr.mxu0 %v423
    %500 = vmatpush1.msra.mxu0 %v422
    %501 = vmatprep.subr.mxu0 %v425
    %502 = vmatpush1.msra.mxu0 %v424
    %503 = vmatprep.subr.mxu0 %v427
    %504 = vmatpush1.msra.mxu0 %v426
    %505 = vmatprep.subr.mxu0 %v429
    %506 = vmatpush1.msra.mxu0 %v428
    %507 = vmatprep.subr.mxu0 %v431
    %508 = vmatpush1.msra.mxu0 %v430
    %509 = vmatprep.subr.mxu0 %v433
    %510 = vmatpush1.msra.mxu0 %v432
    %511 = vmatprep.subr.mxu0 %v435
    %512 = vmatpush1.msra.mxu0 %v434
    %513 = vmatprep.subr.mxu0 %v437
    %514 = vmatpush1.msra.mxu0 %v436
    %515 = vmatprep.subr.mxu0 %v439
    %516 = vmatpush1.msra.mxu0 %v438
    %517 = vmatprep.subr.mxu0 %v441
    %518 = vmatpush1.msra.mxu0 %v440
    %519 = vmatprep.subr.mxu0 %v443
    %520 = vmatpush1.msra.mxu0 %v442
    %521 = vmatprep.subr.mxu0 %v445
    %522 = vmatpush1.msra.mxu0 %v444
    %523 = vmatprep.subr.mxu0 %v447
    %524 = vmatpush1.msra.mxu0 %v446
    %525 = vmatprep.subr.mxu0 %v449
    %526 = vmatpush1.msra.mxu0 %v448
    %527 = vmatprep.subr.mxu0 %v451
    %528 = vmatpush1.msra.mxu0 %v450
    %529 = vmatprep.subr.mxu0 %v453
    %530 = vmatpush1.msra.mxu0 %v452
    %531 = vmatprep.subr.mxu0 %v455
    %532 = vmatpush1.msra.mxu0 %v454
    %533 = vmatprep.subr.mxu0 %v457
    %534 = vmatpush1.msra.mxu0 %v456
    %535 = vmatprep.mubr.f32.mxu0 %v393
    %536 = vmatmul.mubr.f32.gmra.mrb[0].mxu0 %v392
    %v537 = vpop.f32.mrb[0].mxu0
    %v538 = vadd.f32 %v464, %v537
    %v539 = vpop.f32.mrb[0].mxu0
    %v540 = vadd.f32 %v468, %v539
    %541 = vdwg.mxu0
    %s542 = sld [smem:[#allocation2 + $0x2]]
    %s543 = smul.f32 %s542, 0.5
    %v544 = vstv %s543
    %v545 = vmul.f32 %v544, %v538
    %v546 = vmul.f32 %v544, %v540
    %v547 = vtanh.pop %v545
    %v548 = vtanh.pop %v546
    %v549 = vmul.f32 %v547, 0.5
    %v550 = vmul.f32 %v548, 0.5
    %v551 = vadd.f32 %v549, 0.5
    %v552 = vadd.f32 %v550, 0.5
    %v553 = vmul.f32 %v538, %v551
    %v554 = vmul.f32 %v540, %v552
    %v555 = vld [vmem:[#allocation12] sm:$0xff]
    %v556 = vld [vmem:[#allocation12 + $0x8] sm:$0xff]
    %v557 = vld [vmem:[#allocation12 + $0x10] sm:$0xff]
    %v558 = vld [vmem:[#allocation12 + $0x18] sm:$0xff]
    %v559 = vld [vmem:[#allocation12 + $0x20] sm:$0xff]
    %v560 = vld [vmem:[#allocation12 + $0x28] sm:$0xff]
    %v561 = vld [vmem:[#allocation12 + $0x30] sm:$0xff]
    %v562 = vld [vmem:[#allocation12 + $0x38] sm:$0xff]
    %v563 = vld [vmem:[#allocation12 + $0x40] sm:$0xff]
    %v564 = vld [vmem:[#allocation12 + $0x48] sm:$0xff]
    %v565 = vld [vmem:[#allocation12 + $0x50] sm:$0xff]
    %v566 = vld [vmem:[#allocation12 + $0x58] sm:$0xff]
    %v567 = vld [vmem:[#allocation12 + $0x60] sm:$0xff]
    %v568 = vld [vmem:[#allocation12 + $0x68] sm:$0xff]
    %v569 = vld [vmem:[#allocation12 + $0x70] sm:$0xff]
    %v570 = vld [vmem:[#allocation12 + $0x78] sm:$0xff]
    %v571 = vld [vmem:[#allocation12 + $0x80] sm:$0xff]
    %v572 = vld [vmem:[#allocation12 + $0x88] sm:$0xff]
    %v573 = vld [vmem:[#allocation12 + $0x90] sm:$0xff]
    %v574 = vld [vmem:[#allocation12 + $0x98] sm:$0xff]
    %v575 = vld [vmem:[#allocation12 + $0xa0] sm:$0xff]
    %v576 = vld [vmem:[#allocation12 + $0xa8] sm:$0xff]
    %v577 = vld [vmem:[#allocation12 + $0xb0] sm:$0xff]
    %v578 = vld [vmem:[#allocation12 + $0xb8] sm:$0xff]
    %v579 = vld [vmem:[#allocation12 + $0xc0] sm:$0xff]
    %v580 = vld [vmem:[#allocation12 + $0xc8] sm:$0xff]
    %v581 = vld [vmem:[#allocation12 + $0xd0] sm:$0xff]
    %v582 = vld [vmem:[#allocation12 + $0xd8] sm:$0xff]
    %v583 = vld [vmem:[#allocation12 + $0xe0] sm:$0xff]
    %v584 = vld [vmem:[#allocation12 + $0xe8] sm:$0xff]
    %v585 = vld [vmem:[#allocation12 + $0xf0] sm:$0xff]
    %v586 = vld [vmem:[#allocation12 + $0xf8] sm:$0xff]
    %v587 = vld [vmem:[%s6 + $0x3] sm:$0x1]
    %v588 = vlaneseq
    %v589 = vshrl.u32 %v588, 7
    %v590 = vsub.s32 0, %v589
    %v591 = vrot.slane %v587, %v590
    %592 = vmatprep.subr.mxu0 0.0
    %593 = vmatpush1.msra.mxu0 %v555
    %594 = vmatprep.subr.mxu0 0.0
    %595 = vmatpush1.msra.mxu0 %v556
    %596 = vmatprep.subr.mxu0 0.0
    %597 = vmatpush1.msra.mxu0 %v557
    %598 = vmatprep.subr.mxu0 0.0
    %599 = vmatpush1.msra.mxu0 %v558
    %600 = vmatprep.subr.mxu0 0.0
    %601 = vmatpush1.msra.mxu0 %v559
    %602 = vmatprep.subr.mxu0 0.0
    %603 = vmatpush1.msra.mxu0 %v560
    %604 = vmatprep.subr.mxu0 0.0
    %605 = vmatpush1.msra.mxu0 %v561
    %606 = vmatprep.subr.mxu0 0.0
    %607 = vmatpush1.msra.mxu0 %v562
    %608 = vmatprep.subr.mxu0 0.0
    %609 = vmatpush1.msra.mxu0 %v563
    %610 = vmatprep.subr.mxu0 0.0
    %611 = vmatpush1.msra.mxu0 %v564
    %612 = vmatprep.subr.mxu0 0.0
    %613 = vmatpush1.msra.mxu0 %v565
    %614 = vmatprep.subr.mxu0 0.0
    %615 = vmatpush1.msra.mxu0 %v566
    %616 = vmatprep.subr.mxu0 0.0
    %617 = vmatpush1.msra.mxu0 %v567
    %618 = vmatprep.subr.mxu0 0.0
    %619 = vmatpush1.msra.mxu0 %v568
    %620 = vmatprep.subr.mxu0 0.0
    %621 = vmatpush1.msra.mxu0 %v569
    %622 = vmatprep.subr.mxu0 0.0
    %623 = vmatpush1.msra.mxu0 %v570
    %624 = vmatprep.subr.mxu0 0.0
    %625 = vmatpush1.msra.mxu0 %v571
    %626 = vmatprep.subr.mxu0 0.0
    %627 = vmatpush1.msra.mxu0 %v572
    %628 = vmatprep.subr.mxu0 0.0
    %629 = vmatpush1.msra.mxu0 %v573
    %630 = vmatprep.subr.mxu0 0.0
    %631 = vmatpush1.msra.mxu0 %v574
    %632 = vmatprep.subr.mxu0 0.0
    %633 = vmatpush1.msra.mxu0 %v575
    %634 = vmatprep.subr.mxu0 0.0
    %635 = vmatpush1.msra.mxu0 %v576
    %636 = vmatprep.subr.mxu0 0.0
    %637 = vmatpush1.msra.mxu0 %v577
    %638 = vmatprep.subr.mxu0 0.0
    %639 = vmatpush1.msra.mxu0 %v578
    %640 = vmatprep.subr.mxu0 0.0
    %641 = vmatpush1.msra.mxu0 %v579
    %642 = vmatprep.subr.mxu0 0.0
    %643 = vmatpush1.msra.mxu0 %v580
    %644 = vmatprep.subr.mxu0 0.0
    %645 = vmatpush1.msra.mxu0 %v581
    %646 = vmatprep.subr.mxu0 0.0
    %647 = vmatpush1.msra.mxu0 %v582
    %648 = vmatprep.subr.mxu0 0.0
    %649 = vmatpush1.msra.mxu0 %v583
    %650 = vmatprep.subr.mxu0 0.0
    %651 = vmatpush1.msra.mxu0 %v584
    %652 = vmatprep.subr.mxu0 0.0
    %653 = vmatpush1.msra.mxu0 %v585
    %654 = vmatprep.subr.mxu0 0.0
    %655 = vmatpush1.msra.mxu0 %v586
    %656 = vmatprep.mubr.f32.mxu0 %v554
    %657 = vmatmul.mubr.f32.gmra.mrb[0].mxu0 %v553
    %v658 = vpop.f32.mrb[0].mxu0
    %v659 = vadd.f32 %v591, %v658
    %v660 = vpop.f32.mrb[0].mxu0
    %661 = vdwg.mxu0
    %662 = vst [vmem:[#allocation13] sm:$0xff] %v659
    // Predicated region
    $region54: #{tpu_custom_call.1} parent=1 // pred_check
      _
    $region55: #{tpu_custom_call.1} parent=1 // pred_check_branch
      %664 = sbr.rel (0) target = $region57
    $region56: #{tpu_custom_call.1} parent=1 // pred_region
      %s666 = ssub.s32 128, 128
      %667 = vsyncadd [#allocation4], %s666
      %s669 = sshll.u32 [#allocation13], 4
      %s670 = int_to_ptr.vmem [resolvable:$true] %s669
      %672 = dma.vmem_to_hbm [thread:$0]  %s670, 128, %s7, [#allocation4]
    $region57: #{tpu_custom_call.1} parent=1 // pred_fallthru
      _
    // Predicated region
    $region58: #{tpu_custom_call.1} parent=1 // pred_check
      _
    $region59: #{tpu_custom_call.1} parent=1 // pred_check_branch
      %674 = sbr.rel (0) target = $region61
    $region60: #{tpu_custom_call.1} parent=1 // pred_region
      %675 = dma.done [#allocation4], 128
    $region61: #{tpu_custom_call.1} parent=1 // pred_fallthru
      _
    %676 = vsyncpa [#allocation3], 1
    %677 = vsyncpa [#allocation8], 1
    %678 = vsyncpa [#allocation11], 1
    %679 = vsyncpa [#allocation4], 1
    %680 = vsyncpa [#allocation5], 1

</llo_original>
